<compile_context>
chip_gen: v6e
topology: v6e:2x2x1
jax: 0.10.0
libtpu: 0.0.40
codegen_flags: <defaults>
</compile_context>

<pallas_src>
import functools
import math

import jax
import jax.numpy as jnp
from jax import lax
from jax.experimental import pallas as pl
from jax.experimental.pallas import tpu as pltpu

PAD = 0          # Constants.PAD
NEG_INF = -1e9   # additive mask value (matches masked_fill(-inf) up to fp softmax)
LN_EPS = 1e-5


def _round_up(x, m):
    return (x + m - 1) // m * m


# ---------------------------------------------------------------------------
# Kernel 1: embedding lookup (one-hot MXU gather, table VMEM-resident)
# ---------------------------------------------------------------------------
def _emb_onehot_kernel(ids_ref, emb_ref, out_ref):
    ids = ids_ref[...]                                   # (T, 1) int32
    T = ids.shape[0]
    Vp = emb_ref.shape[0]
    iota = lax.broadcasted_iota(jnp.int32, (T, Vp), 1)
    onehot = (iota == ids).astype(emb_ref.dtype)         # OOB/pad id -> zero row
    out_ref[...] = jnp.dot(onehot, emb_ref[...],
                           preferred_element_type=jnp.float32).astype(out_ref.dtype)


def embedding_lookup(ids, table, tok_block=256):
    """ids: (n_tok,) int32; table: (V, D) float32 (row PAD already zeroed)."""
    (n_tok,) = ids.shape
    V, D = table.shape
    Vp = _round_up(V, 8)
    table_p = jnp.pad(table, ((0, Vp - V), (0, 0))) if Vp != V else table

    T = min(_round_up(n_tok, 8), tok_block)
    n_pad = _round_up(n_tok, T)
    ids_p = jnp.pad(ids.astype(jnp.int32), (0, n_pad - n_tok),
                    constant_values=PAD).reshape(n_pad, 1)

    out = pl.pallas_call(
        _emb_onehot_kernel,
        out_shape=jax.ShapeDtypeStruct((n_pad, D), table.dtype),
        grid=(n_pad // T,),
        in_specs=[
            pl.BlockSpec((T, 1), lambda i: (i, 0)),
            # whole table, constant block index -> fetched once, stays in VMEM
            pl.BlockSpec((Vp, D), lambda i: (0, 0)),
        ],
        out_specs=pl.BlockSpec((T, D), lambda i: (i, 0)),
        compiler_params=pltpu.CompilerParams(dimension_semantics=("parallel",)),
    )(ids_p, table_p)
    return out[:n_tok]
    # TODO(synk): for vocabularies too large for VMEM (e.g. >=16k x 512 f32 on
    # v7x's 64 MiB) switch to a vocab-tiled accumulator grid or a manual HBM
    # row-gather (pl.ANY + make_async_copy); the one-hot trick is small-V only.


# ---------------------------------------------------------------------------
# Kernel 2: bias-free matmul X @ W (used for the fused QKV / Q / KV projections)
# ---------------------------------------------------------------------------
def _matmul_kernel(x_ref, w_ref, o_ref):
    o_ref[...] = jnp.dot(x_ref[...], w_ref[...],
                         preferred_element_type=jnp.float32).astype(o_ref.dtype)


def matmul(x, w, tm=128):
    M, K = x.shape
    K2, N = w.shape
    assert K == K2
    TM = min(_round_up(M, 8), tm)
    Mp = _round_up(M, TM)
    x_p = jnp.pad(x, ((0, Mp - M), (0, 0))) if Mp != M else x
    out = pl.pallas_call(
        _matmul_kernel,
        out_shape=jax.ShapeDtypeStruct((Mp, N), x.dtype),
        grid=(Mp // TM,),
        in_specs=[pl.BlockSpec((TM, K), lambda i: (i, 0)),
                  pl.BlockSpec((K, N), lambda i: (0, 0))],   # weight VMEM-resident
        out_specs=pl.BlockSpec((TM, N), lambda i: (i, 0)),
        compiler_params=pltpu.CompilerParams(dimension_semantics=("parallel",)),
    )(x_p, w)
    return out[:M] if Mp != M else out


# ---------------------------------------------------------------------------
# Kernel 3: multi-head attention (one grid step per batch element)
#   * reads q/k/v straight from the (L, H*d) projection layout (lane slices)
#   * pad mask passed as (1, Lk) additive key bias; causal mask built in-kernel
#   * output written lane-dense as (Lq, H*d_v)
# ---------------------------------------------------------------------------
def _attend(q, k, v, kbias, n_head, d_k, d_v, scale, causal):
    Lq, Lk = q.shape[0], k.shape[0]
    if causal:
        rq = lax.broadcasted_iota(jnp.int32, (Lq, Lk), 0)
        rk = lax.broadcasted_iota(jnp.int32, (Lq, Lk), 1)
        cbias = jnp.where(rk > rq, NEG_INF, 0.0)
    else:
        cbias = None
    outs = []
    for h in range(n_head):                       # static unroll over heads
        qh = q[:, h * d_k:(h + 1) * d_k]
        kh = k[:, h * d_k:(h + 1) * d_k]
        vh = v[:, h * d_v:(h + 1) * d_v]
        # contraction on both last dims == "rhs transposed" matmul on the MXU
        s = lax.dot_general(qh, kh, (((1,), (1,)), ((), ())),
                            preferred_element_type=jnp.float32) * scale
        s = s + kbias
        if cbias is not None:
            s = s + cbias
        s = s - jnp.max(s, axis=-1, keepdims=True)
        p = jnp.exp(s)
        p = p * pl.reciprocal(jnp.sum(p, axis=-1, keepdims=True), approx=True)
        outs.append(jnp.dot(p, vh, preferred_element_type=jnp.float32))
    return jnp.concatenate(outs, axis=-1)         # (Lq, H*d_v), lane-dense


def _mha_self_kernel(qkv_ref, kb_ref, o_ref, *, n_head, d_k, d_v, scale):
    x = qkv_ref[0].astype(jnp.float32)            # (Lq, H*(2*d_k + d_v))
    nqk = n_head * d_k
    q, k, v = x[:, :nqk], x[:, nqk:2 * nqk], x[:, 2 * nqk:]
    o = _attend(q, k, v, kb_ref[0], n_head, d_k, d_v, scale, causal=True)
    o_ref[0] = o.astype(o_ref.dtype)


def _mha_cross_kernel(q_ref, kv_ref, kb_ref, o_ref, *, n_head, d_k, d_v, scale):
    q = q_ref[0].astype(jnp.float32)              # (Lq, H*d_k)
    kv = kv_ref[0].astype(jnp.float32)            # (Lk, H*(d_k + d_v))
    nqk = n_head * d_k
    k, v = kv[:, :nqk], kv[:, nqk:]
    o = _attend(q, k, v, kb_ref[0], n_head, d_k, d_v, scale, causal=False)
    o_ref[0] = o.astype(o_ref.dtype)


def mha_self(qkv, kbias, n_head, d_k, d_v, scale):
    """qkv: (B, Lq, H*(2*d_k+d_v)); kbias: (B, 1, Lq) additive key-pad bias."""
    B, Lq, Ht = qkv.shape
    Hdv = n_head * d_v
    return pl.pallas_call(
        functools.partial(_mha_self_kernel, n_head=n_head, d_k=d_k, d_v=d_v, scale=scale),
        out_shape=jax.ShapeDtypeStruct((B, Lq, Hdv), qkv.dtype),
        grid=(B,),
        in_specs=[pl.BlockSpec((1, Lq, Ht), lambda b: (b, 0, 0)),
                  pl.BlockSpec((1, 1, Lq), lambda b: (b, 0, 0))],
        out_specs=pl.BlockSpec((1, Lq, Hdv), lambda b: (b, 0, 0)),
        compiler_params=pltpu.CompilerParams(dimension_semantics=("parallel",)),
    )(qkv, kbias)
    # TODO(synk): for long sequences replace with a flash-style KV-tiled kernel.


def mha_cross(q, kv, kbias, n_head, d_k, d_v, scale):
    """q: (B, Lq, H*d_k); kv: (B, Lk, H*(d_k+d_v)); kbias: (B, 1, Lk)."""
    B, Lq, Hdk = q.shape
    _, Lk, Hkv = kv.shape
    Hdv = n_head * d_v
    return pl.pallas_call(
        functools.partial(_mha_cross_kernel, n_head=n_head, d_k=d_k, d_v=d_v, scale=scale),
        out_shape=jax.ShapeDtypeStruct((B, Lq, Hdv), q.dtype),
        grid=(B,),
        in_specs=[pl.BlockSpec((1, Lq, Hdk), lambda b: (b, 0, 0)),
                  pl.BlockSpec((1, Lk, Hkv), lambda b: (b, 0, 0)),
                  pl.BlockSpec((1, 1, Lk), lambda b: (b, 0, 0))],
        out_specs=pl.BlockSpec((1, Lq, Hdv), lambda b: (b, 0, 0)),
        compiler_params=pltpu.CompilerParams(dimension_semantics=("parallel",)),
    )(q, kv, kbias)


# ---------------------------------------------------------------------------
# Kernel 4: fused output-projection + bias + residual + LayerNorm
# ---------------------------------------------------------------------------
def _proj_add_ln_kernel(ctx_ref, res_ref, w_ref, b_ref, g_ref, be_ref, o_ref, *, eps):
    y = jnp.dot(ctx_ref[...].astype(jnp.float32), w_ref[...],
                preferred_element_type=jnp.float32)
    y = y + b_ref[...] + res_ref[...].astype(jnp.float32)
    mu = jnp.mean(y, axis=-1, keepdims=True)
    yc = y - mu
    var = jnp.mean(yc * yc, axis=-1, keepdims=True)
    o_ref[...] = (yc * lax.rsqrt(var + eps) * g_ref[...] + be_ref[...]).astype(o_ref.dtype)


def proj_add_ln(ctx, res, w, b, gamma, beta, eps=LN_EPS, tm=128):
    M, Kc = ctx.shape
    _, D = w.shape
    TM = min(_round_up(M, 8), tm)
    Mp = _round_up(M, TM)
    if Mp != M:
        ctx = jnp.pad(ctx, ((0, Mp - M), (0, 0)))
        res = jnp.pad(res, ((0, Mp - M), (0, 0)))
    out = pl.pallas_call(
        functools.partial(_proj_add_ln_kernel, eps=eps),
        out_shape=jax.ShapeDtypeStruct((Mp, D), res.dtype),
        grid=(Mp // TM,),
        in_specs=[pl.BlockSpec((TM, Kc), lambda i: (i, 0)),
                  pl.BlockSpec((TM, D), lambda i: (i, 0)),
                  pl.BlockSpec((Kc, D), lambda i: (0, 0)),
                  pl.BlockSpec((1, D), lambda i: (0, 0)),
                  pl.BlockSpec((1, D), lambda i: (0, 0)),
                  pl.BlockSpec((1, D), lambda i: (0, 0))],
        out_specs=pl.BlockSpec((TM, D), lambda i: (i, 0)),
        compiler_params=pltpu.CompilerParams(dimension_semantics=("parallel",)),
    )(ctx, res, w, b.reshape(1, D), gamma.reshape(1, D), beta.reshape(1, D))
    return out[:M] if Mp != M else out


# ---------------------------------------------------------------------------
# Kernel 5: fused position-wise FFN (+bias, ReLU, second matmul, bias,
#           residual, LayerNorm) — the d_inner intermediate never leaves VMEM
# ---------------------------------------------------------------------------
def _ffn_add_ln_kernel(x_ref, w1_ref, b1_ref, w2_ref, b2_ref, g_ref, be_ref, o_ref, *, eps):
    x = x_ref[...].astype(jnp.float32)
    h = jnp.dot(x, w1_ref[...], preferred_element_type=jnp.float32) + b1_ref[...]
    h = jnp.maximum(h, 0.0)
    y = jnp.dot(h, w2_ref[...], preferred_element_type=jnp.float32) + b2_ref[...] + x
    mu = jnp.mean(y, axis=-1, keepdims=True)
    yc = y - mu
    var = jnp.mean(yc * yc, axis=-1, keepdims=True)
    o_ref[...] = (yc * lax.rsqrt(var + eps) * g_ref[...] + be_ref[...]).astype(o_ref.dtype)


def ffn_add_ln(x, w1, b1, w2, b2, gamma, beta, eps=LN_EPS, tm=128):
    M, D = x.shape
    _, Di = w1.shape
    TM = min(_round_up(M, 8), tm)
    Mp = _round_up(M, TM)
    x_p = jnp.pad(x, ((0, Mp - M), (0, 0))) if Mp != M else x
    out = pl.pallas_call(
        functools.partial(_ffn_add_ln_kernel, eps=eps),
        out_shape=jax.ShapeDtypeStruct((Mp, D), x.dtype),
        grid=(Mp // TM,),
        in_specs=[pl.BlockSpec((TM, D), lambda i: (i, 0)),
                  pl.BlockSpec((D, Di), lambda i: (0, 0)),
                  pl.BlockSpec((1, Di), lambda i: (0, 0)),
                  pl.BlockSpec((Di, D), lambda i: (0, 0)),
                  pl.BlockSpec((1, D), lambda i: (0, 0)),
                  pl.BlockSpec((1, D), lambda i: (0, 0)),
                  pl.BlockSpec((1, D), lambda i: (0, 0))],
        out_specs=pl.BlockSpec((TM, D), lambda i: (i, 0)),
        compiler_params=pltpu.CompilerParams(dimension_semantics=("parallel",)),
    )(x_p, w1, b1.reshape(1, Di), w2, b2.reshape(1, D),
      gamma.reshape(1, D), beta.reshape(1, D))
    return out[:M] if Mp != M else out


# ---------------------------------------------------------------------------
# SADecoder forward (composition of the kernels above)
# ---------------------------------------------------------------------------
def _self_attn_block(x, kbias, p, H, d_k, d_v, scale):
    B, L, D = x.shape
    x2 = x.reshape(B * L, D)
    w_qkv = jnp.concatenate([p["wq"], p["wk"], p["wv"]], axis=1)   # fused QKV weight
    qkv = matmul(x2, w_qkv).reshape(B, L, -1)
    ctx = mha_self(qkv, kbias, H, d_k, d_v, scale).reshape(B * L, H * d_v)
    out = proj_add_ln(ctx, x2, p["wo"], p["bo"], p["ln_g"], p["ln_b"])
    return out.reshape(B, L, D)


def _cross_attn_block(x, enc, kbias, p, H, d_k, d_v, scale):
    B, Lq, D = x.shape
    _, Lk, _ = enc.shape
    x2 = x.reshape(B * Lq, D)
    enc2 = enc.reshape(B * Lk, D)
    q = matmul(x2, p["wq"]).reshape(B, Lq, -1)
    w_kv = jnp.concatenate([p["wk"], p["wv"]], axis=1)             # fused KV weight
    kv = matmul(enc2, w_kv).reshape(B, Lk, -1)
    ctx = mha_cross(q, kv, kbias, H, d_k, d_v, scale).reshape(B * Lq, H * d_v)
    out = proj_add_ln(ctx, x2, p["wo"], p["bo"], p["ln_g"], p["ln_b"])
    return out.reshape(B, Lq, D)


def _ffn_block(x, p):
    B, L, D = x.shape
    x2 = x.reshape(B * L, D)
    out = ffn_add_ln(x2, p["w1"], p["b1"], p["w2"], p["b2"], p["ln_g"], p["ln_b"])
    return out.reshape(B, L, D)


def sa_decoder_forward(tgt_seq, src_seq, enc_output, params, n_head, d_k, d_v):
    B, Lt = tgt_seq.shape
    _, Ls, _ = enc_output.shape
    d_model = params["emb"].shape[1]
    # LaMP ScaledDotProductAttention: temper = sqrt(d_model)
    scale = 1.0 / math.sqrt(d_model)

    # Only the (B,1,Lk) key-pad biases leave XLA; causal mask is built in-kernel.
    # NOTE: fully-masked rows yield a near-uniform softmax here (torch would NaN).
    tgt_kbias = jnp.where(tgt_seq == PAD, NEG_INF, 0.0).astype(jnp.float32).reshape(B, 1, Lt)
    src_kbias = jnp.where(src_seq == PAD, NEG_INF, 0.0).astype(jnp.float32).reshape(B, 1, Ls)

    x = embedding_lookup(tgt_seq.reshape(-1), params["emb"]).reshape(B, Lt, d_model)
    for lp in params["layers"]:
        x = _self_attn_block(x, tgt_kbias, lp["slf"], n_head, d_k, d_v, scale)
        x = _cross_attn_block(x, enc_output, src_kbias, lp["enc"], n_head, d_k, d_v, scale)
        x = _ffn_block(x, lp["ffn"])
    # TODO(synk): dec_output_int / int_preds branch of AutoregressiveDecoderLayer
    # is unused when int_preds=False and is not implemented.
    return (x,)


# ---------------------------------------------------------------------------
# Pure-JAX reference (same math, no Pallas) for correctness checking
# ---------------------------------------------------------------------------
def _ref_ln(y, g, b, eps=LN_EPS):
    mu = jnp.mean(y, -1, keepdims=True)
    yc = y - mu
    var = jnp.mean(yc * yc, -1, keepdims=True)
    return yc * lax.rsqrt(var + eps) * g + b


def _ref_mha(x_q, x_kv, bias, p, H, d_k, d_v, scale):
    B, Lq, D = x_q.shape
    _, Lk, _ = x_kv.shape
    q = (x_q @ p["wq"]).reshape(B, Lq, H, d_k).transpose(0, 2, 1, 3)
    k = (x_kv @ p["wk"]).reshape(B, Lk, H, d_k).transpose(0, 2, 1, 3)
    v = (x_kv @ p["wv"]).reshape(B, Lk, H, d_v).transpose(0, 2, 1, 3)
    s = jnp.einsum("bhqd,bhkd->bhqk", q, k) * scale + bias[:, None]
    a = jax.nn.softmax(s, axis=-1)
    ctx = jnp.einsum("bhqk,bhkd->bhqd", a, v)
    ctx = ctx.transpose(0, 2, 1, 3).reshape(B, Lq, H * d_v)
    out = ctx @ p["wo"] + p["bo"]
    return _ref_ln(out + x_q, p["ln_g"], p["ln_b"])


def _ref_ffn(x, p):
    h = jnp.maximum(x @ p["w1"] + p["b1"], 0.0)
    y = h @ p["w2"] + p["b2"]
    return _ref_ln(y + x, p["ln_g"], p["ln_b"])


def reference_forward(tgt_seq, src_seq, enc_output, params, H, d_k, d_v):
    B, Lt = tgt_seq.shape
    _, Ls = src_seq.shape
    d_model = params["emb"].shape[1]
    scale = 1.0 / math.sqrt(d_model)
    pad_k = (tgt_seq == PAD)[:, None, :]
    sub = (jnp.triu(jnp.ones((Lt, Lt), jnp.int32), k=1) > 0)[None]
    slf_bias = jnp.where(jnp.broadcast_to(pad_k, (B, Lt, Lt)) | sub, NEG_INF, 0.0)
    enc_bias = jnp.where(jnp.broadcast_to((src_seq == PAD)[:, None, :], (B, Lt, Ls)),
                         NEG_INF, 0.0)
    x = jnp.take(params["emb"], tgt_seq, axis=0)
    for lp in params["layers"]:
        x = _ref_mha(x, x, slf_bias, lp["slf"], H, d_k, d_v, scale)
        x = _ref_mha(x, enc_output, enc_bias, lp["enc"], H, d_k, d_v, scale)
        x = _ref_ffn(x, lp["ffn"])
    return x


# ---------------------------------------------------------------------------
if __name__ == "__main__":
    # Small deterministic configuration.
    B, Lt, Ls = 2, 8, 16
    V = 40                       # n_tgt_vocab
    d_model = 128                # d_word_vec == d_model
    n_head, d_k, d_v = 4, 32, 32
    d_inner = 256
    n_layers = 2

    key = jax.random.PRNGKey(0)
    keys = iter(jax.random.split(key, 64))

    def nrm(shape, s=0.05):
        return jax.random.normal(next(keys), shape, dtype=jnp.float32) * s

    emb = jax.random.normal(next(keys), (V, d_model), dtype=jnp.float32) * 0.5
    emb = emb.at[PAD].set(0.0)   # padding_idx=PAD (forward-time semantics)

    def attn_params():
        return dict(
            wq=nrm((d_model, n_head * d_k)),
            wk=nrm((d_model, n_head * d_k)),
            wv=nrm((d_model, n_head * d_v)),
            wo=nrm((n_head * d_v, d_model)),
            bo=nrm((d_model,), 0.02),
            ln_g=jnp.ones((d_model,), jnp.float32),
            ln_b=jnp.zeros((d_model,), jnp.float32),
        )

    def ffn_params():
        return dict(
            w1=nrm((d_model, d_inner)),
            b1=nrm((d_inner,), 0.02),
            w2=nrm((d_inner, d_model)),
            b2=nrm((d_model,), 0.02),
            ln_g=jnp.ones((d_model,), jnp.float32),
            ln_b=jnp.zeros((d_model,), jnp.float32),
        )

    params = dict(
        emb=emb,
        layers=[dict(slf=attn_params(), enc=attn_params(), ffn=ffn_params())
                for _ in range(n_layers)],
    )

    tgt_seq = jax.random.randint(next(keys), (B, Lt), 1, V, dtype=jnp.int32)
    tgt_seq = tgt_seq.at[0, -2:].set(PAD).at[1, -1:].set(PAD)
    src_seq = jax.random.randint(next(keys), (B, Ls), 1, 30, dtype=jnp.int32)
    src_seq = src_seq.at[0, -3:].set(PAD)
    enc_output = jax.random.normal(next(keys), (B, Ls, d_model), dtype=jnp.float32)

    (dec_out,) = sa_decoder_forward(tgt_seq, src_seq, enc_output, params,
                                    n_head, d_k, d_v)
    dec_out = jax.block_until_ready(dec_out)

    ref = reference_forward(tgt_seq, src_seq, enc_output, params, n_head, d_k, d_v)
    assert dec_out.shape == (B, Lt, d_model)
    # Only non-exactness: MXU f32 rounding + approx EUP reciprocal in softmax.
    assert jnp.allclose(dec_out, ref, atol=1e-2, rtol=1e-2), \
        float(jnp.max(jnp.abs(dec_out - ref)))

    print("KERNEL_OK")
</pallas_src>

<mosaic_0001>
module attributes {stable_mosaic.version = 11 : i64} {
  func.func @_emb_onehot_kernel(%arg0: i32, %arg1: memref<16x1xi32, #tpu.memory_space<vmem>>, %arg2: memref<40x128xf32, #tpu.memory_space<vmem>>, %arg3: memref<16x128xf32, #tpu.memory_space<vmem>>) attributes {dimension_semantics = [#tpu.dimension_semantics<parallel>], iteration_bounds = array<i64: 1>, scalar_prefetch = 0 : i64, scratch_operands = 0 : i64, tpu.core_type = #tpu.core_type<tc>, window_params = [{transform_indices = @transform_0, window_bounds = array<i64: 16, 1>}, {pipeline_mode = #tpu.pipeline_mode<synchronous>, transform_indices = @transform_1, window_bounds = array<i64: 40, 128>}, {transform_indices = @transform_2, window_bounds = array<i64: 16, 128>}]} {
    %c0 = arith.constant 0 : index
    %c0_0 = arith.constant 0 : index
    %0 = vector.load %arg1[%c0, %c0_0] : memref<16x1xi32, #tpu.memory_space<vmem>>, vector<16x1xi32>
    %1 = tpu.iota {dimensions = array<i32: 1>} : vector<16x40xi32>
    %2 = vector.broadcast %0 : vector<16x1xi32> to vector<16x40xi32>
    %3 = arith.cmpi eq, %1, %2 : vector<16x40xi32>
    %4 = arith.extui %3 : vector<16x40xi1> to vector<16x40xi32>
    %5 = arith.sitofp %4 : vector<16x40xi32> to vector<16x40xf32>
    %c0_1 = arith.constant 0 : index
    %c0_2 = arith.constant 0 : index
    %6 = vector.load %arg2[%c0_1, %c0_2] : memref<40x128xf32, #tpu.memory_space<vmem>>, vector<40x128xf32>
    %cst = arith.constant dense<0.000000e+00> : vector<16x128xf32>
    %7 = tpu.matmul %5, %6, %cst {dimension_numbers = #tpu.dot_dimension_numbers<[1], [0], [0], [1], [0, 0, 1, 1], [], []>} : vector<16x40xf32>, vector<40x128xf32>, vector<16x128xf32> -> vector<16x128xf32>
    %c0_3 = arith.constant 0 : index
    %c0_4 = arith.constant 0 : index
    %8 = vector.load %arg3[%c0_3, %c0_4] : memref<16x128xf32, #tpu.memory_space<vmem>>, vector<16x128xf32>
    tpu.vector_store %arg3[%c0_3, %c0_4], %7 {strides = array<i32>} : memref<16x128xf32, #tpu.memory_space<vmem>>, vector<16x128xf32>,
    return
  }
  func.func @transform_0(%arg0: i32) -> (i32, i32) {
    %c0_i32 = arith.constant 0 : i32
    %c0_i32_0 = arith.constant 0 : i32
    return %arg0, %c0_i32 : i32, i32
  }
  func.func @transform_1(%arg0: i32) -> (i32, i32) {
    %c0_i32 = arith.constant 0 : i32
    %c0_i32_0 = arith.constant 0 : i32
    %c0_i32_1 = arith.constant 0 : i32
    return %c0_i32, %c0_i32_0 : i32, i32
  }
  func.func @transform_2(%arg0: i32) -> (i32, i32) {
    %c0_i32 = arith.constant 0 : i32
    %c0_i32_0 = arith.constant 0 : i32
    return %arg0, %c0_i32 : i32, i32
  }
}

</mosaic_0001>

<llo_original>
// kernel: tpu_custom_call.1
$region0: #{tpu_custom_call.1}
  #allocation0 [shape = 'u32[]', space=smem, size = 0x4, offset = 0x4, fixed_abs, tag = 'smem constant byte address 0x4 - core index']
  #allocation1 [shape = 'u32[144,128]{1,0:T(1,128)}', space=vmem, size = 0x12000, scoped, tag = 'internal scratch']
  %s0 = inlined_call_operand.vmem [shape: s32[16,1], index: 0, kind: input, shape index: {}]
  %s1 = inlined_call_operand.hbm [shape: f32[40,128], index: 1, kind: input, shape index: {}]
  %s2 = inlined_call_operand.hbm [shape: f32[16,128], index: 2, kind: output, shape index: {}]
  %s3 = sld [smem:[#allocation0]]
  $region22: #{tpu_custom_call.1} parent=0
    _
  %s5 = ssub.s32 1, %s3
  %s6 = scalar_select 0, %s5, %s3
  $region1: #{tpu_custom_call.1} parent=0
    #allocation2 [shape = 'u8[20480]{0}', space=vmem, size = 0x5000, scoped, tag = 'input window, operand 1, single buffered']
    #allocation3 [shape = 's32[1]{0}', space=sflag, size = 0x4, scoped, tag = 'scoped memory for tpu_custom_call.1']
    #allocation4 [shape = 's32[1]{0}', space=sflag, size = 0x4, scoped, tag = 'scoped memory for tpu_custom_call.1']
    #allocation5 [shape = 'u8[8192]{0}', space=vmem, size = 0x2000, scoped, tag = 'output window, operand 0, single buffered']
    %7 = vsyncpa [#allocation3], 0
    %8 = vsyncpa [#allocation4], 0
    // Predicated region
    $region2: #{tpu_custom_call.1} parent=1 // pred_check
      _
    $region3: #{tpu_custom_call.1} parent=1 // pred_check_branch
      %10 = sbr.rel (0) target = $region5
    $region4: #{tpu_custom_call.1} parent=1 // pred_region
      _
    $region5: #{tpu_custom_call.1} parent=1 // pred_fallthru
      _
    // Predicated region
    $region6: #{tpu_custom_call.1} parent=1 // pred_check
      _
    $region7: #{tpu_custom_call.1} parent=1 // pred_check_branch
      %12 = sbr.rel (0) target = $region9
    $region8: #{tpu_custom_call.1} parent=1 // pred_region
      %s14 = ssub.s32 640, 640
      %15 = vsyncadd [#allocation3], %s14
      %s16 = sshll.u32 [#allocation2], 4
      %s17 = int_to_ptr.vmem [resolvable:$true] %s16
      %22 = dma.hbm_to_vmem [thread:$0]  %s1, 640, %s17, [#allocation3], 128, 128, 8
    $region9: #{tpu_custom_call.1} parent=1 // pred_fallthru
      _
    // Predicated region
    $region10: #{tpu_custom_call.1} parent=1 // pred_check
      _
    $region11: #{tpu_custom_call.1} parent=1 // pred_check_branch
      %24 = sbr.rel (0) target = $region13
    $region12: #{tpu_custom_call.1} parent=1 // pred_region
      %25 = dma.done [#allocation3], 640
    $region13: #{tpu_custom_call.1} parent=1 // pred_fallthru
      _
    %v26 = vld [vmem:[%s0] sm:$0xff]
    %v27 = vld [vmem:[%s0 + $0x8] sm:$0xff]
    %v28 = vlaneseq
    %v29 = vand.u32 %v28, 127
    %30 = vset.pattern.permute.xlu0 0
    %31 = vperm.xlu0 %30, %v26
    %v32 = vpop.permute.xlu0 %31
    %33 = vset.pattern.permute.xlu0 0
    %34 = vperm.xlu0 %33, %v27
    %v35 = vpop.permute.xlu0 %34
    %vm36 = vcmp.eq.s32.totalorder %v29, %v32
    %vm37 = vcmp.eq.s32.totalorder %v29, %v35
    %v38 = vsel %vm36, 1, 0
    %v39 = vsel %vm37, 1, 0
    %v40 = vcvt.s32.f32 %v38
    %v41 = vcvt.s32.f32 %v39
    %v42 = vld [vmem:[#allocation2] sm:$0xff]
    %v43 = vld [vmem:[#allocation2 + $0x8] sm:$0xff]
    %v44 = vld [vmem:[#allocation2 + $0x10] sm:$0xff]
    %v45 = vld [vmem:[#allocation2 + $0x18] sm:$0xff]
    %v46 = vld [vmem:[#allocation2 + $0x20] sm:$0xff]
    %vm47 = vcmask 326656
    %v49 = vsel %vm47, %v40, 0
    %v52 = vsel %vm47, %v41, 0
    %54 = vmatprep.subr.mxu0 0.0
    %55 = vmatpush1.msra.mxu0 0.0
    %56 = vmatprep.subr.mxu0 0.0
    %57 = vmatpush1.msra.mxu0 0.0
    %58 = vmatprep.subr.mxu0 0.0
    %59 = vmatpush1.msra.mxu0 0.0
    %60 = vmatprep.subr.mxu0 0.0
    %61 = vmatpush1.msra.mxu0 0.0
    %62 = vmatprep.subr.mxu0 0.0
    %63 = vmatpush1.msra.mxu0 0.0
    %64 = vmatprep.subr.mxu0 0.0
    %65 = vmatpush1.msra.mxu0 0.0
    %66 = vmatprep.subr.mxu0 0.0
    %67 = vmatpush1.msra.mxu0 0.0
    %68 = vmatprep.subr.mxu0 0.0
    %69 = vmatpush1.msra.mxu0 0.0
    %70 = vmatprep.subr.mxu0 0.0
    %71 = vmatpush1.msra.mxu0 0.0
    %72 = vmatprep.subr.mxu0 0.0
    %73 = vmatpush1.msra.mxu0 0.0
    %74 = vmatprep.subr.mxu0 0.0
    %75 = vmatpush1.msra.mxu0 0.0
    %76 = vmatprep.subr.mxu0 0.0
    %77 = vmatpush1.msra.mxu0 %v46
    %78 = vmatprep.subr.mxu0 0.0
    %79 = vmatpush1.msra.mxu0 %v45
    %80 = vmatprep.subr.mxu0 0.0
    %81 = vmatpush1.msra.mxu0 %v44
    %82 = vmatprep.subr.mxu0 0.0
    %83 = vmatpush1.msra.mxu0 %v43
    %84 = vmatprep.subr.mxu0 0.0
    %85 = vmatpush1.msra.mxu0 %v42
    %86 = vmatprep.subr.mxu0 0.0
    %87 = vmatpush2.msra.mxu0 0.0
    %88 = vmatprep.subr.mxu0 0.0
    %89 = vmatpush2.msra.mxu0 0.0
    %90 = vmatprep.subr.mxu0 0.0
    %91 = vmatpush2.msra.mxu0 0.0
    %92 = vmatprep.subr.mxu0 0.0
    %93 = vmatpush2.msra.mxu0 0.0
    %94 = vmatprep.subr.mxu0 0.0
    %95 = vmatpush2.msra.mxu0 0.0
    %96 = vmatprep.subr.mxu0 0.0
    %97 = vmatpush2.msra.mxu0 0.0
    %98 = vmatprep.subr.mxu0 0.0
    %99 = vmatpush2.msra.mxu0 0.0
    %100 = vmatprep.subr.mxu0 0.0
    %101 = vmatpush2.msra.mxu0 0.0
    %102 = vmatprep.subr.mxu0 0.0
    %103 = vmatpush2.msra.mxu0 0.0
    %104 = vmatprep.subr.mxu0 0.0
    %105 = vmatpush2.msra.mxu0 0.0
    %106 = vmatprep.subr.mxu0 0.0
    %107 = vmatpush2.msra.mxu0 0.0
    %108 = vmatprep.subr.mxu0 0.0
    %109 = vmatpush2.msra.mxu0 0.0
    %110 = vmatprep.subr.mxu0 0.0
    %111 = vmatpush2.msra.mxu0 0.0
    %112 = vmatprep.subr.mxu0 0.0
    %113 = vmatpush2.msra.mxu0 0.0
    %114 = vmatprep.subr.mxu0 0.0
    %115 = vmatpush2.msra.mxu0 0.0
    %116 = vmatprep.subr.mxu0 0.0
    %117 = vmatpush2.msra.mxu0 0.0
    %118 = vmatprep.mubr.f32.mxu0 0.0
    %119 = vmatmul.mubr.f32.gmra.mxu0 %v49
    %v120 = vpop.f32.mrf.mxu0
    %v121 = vadd.f32 0.0, %v120
    %v122 = vpop.f32.mrf.mxu0
    %123 = vmatprep.mubr.f32.mxu0 0.0
    %124 = vmatmul.mubr.f32.gmra.mxu0 %v52
    %v125 = vpop.f32.mrf.mxu0
    %v126 = vadd.f32 0.0, %v125
    %v127 = vpop.f32.mrf.mxu0
    %128 = vdwg.mxu0
    %129 = vst [vmem:[#allocation5] sm:$0xff] %v121
    %130 = vst [vmem:[#allocation5 + $0x8] sm:$0xff] %v126
    // Predicated region
    $region14: #{tpu_custom_call.1} parent=1 // pred_check
      _
    $region15: #{tpu_custom_call.1} parent=1 // pred_check_branch
      %132 = sbr.rel (0) target = $region17
    $region16: #{tpu_custom_call.1} parent=1 // pred_region
      %s134 = ssub.s32 256, 256
      %135 = vsyncadd [#allocation4], %s134
      %s136 = sshll.u32 [#allocation5], 4
      %s137 = int_to_ptr.vmem [resolvable:$true] %s136
      %142 = dma.vmem_to_hbm [thread:$0]  %s137, 256, %s2, [#allocation4], 128, 128, 8
    $region17: #{tpu_custom_call.1} parent=1 // pred_fallthru
      _
    // Predicated region
    $region18: #{tpu_custom_call.1} parent=1 // pred_check
      _
    $region19: #{tpu_custom_call.1} parent=1 // pred_check_branch
      %144 = sbr.rel (0) target = $region21
    $region20: #{tpu_custom_call.1} parent=1 // pred_region
      %145 = dma.done [#allocation4], 256
    $region21: #{tpu_custom_call.1} parent=1 // pred_fallthru
      _
    %146 = vsyncpa [#allocation3], 1
    %147 = vsyncpa [#allocation4], 1

</llo_original>
